<compile_context>
chip_gen: v5e
topology: v5e:2x2
jax: 0.10.0
libtpu: 0.0.40
codegen_flags: <defaults>
</compile_context>

<pallas_src>
import functools
import math

import numpy as np
import jax
import jax.numpy as jnp
from jax.experimental import pallas as pl
from jax.experimental.pallas import tpu as pltpu


# ----------------------------------------------------------------------------
# helpers
# ----------------------------------------------------------------------------
def _blk_bytes(shape, dtype):
    return math.prod(shape) * np.dtype(dtype).itemsize


def _vmem_budget_bytes(frac=0.75, fallback=64 << 20):
    """~frac of physical VMEM (leaves headroom for compiler-internal scratch)."""
    cap = fallback
    try:
        info = pltpu.get_tpu_info()
        cap = int(getattr(info, "vmem_capacity_bytes", 0)) or fallback
    except Exception:
        cap = fallback
    return int(cap * frac)


def _cparams(num_grid_axes, blocks):
    """CompilerParams: parallel grid axes + a vmem limit sized from the
    per-step blocks (x2 for double buffering) and capped below physical VMEM."""
    est = 2 * sum(_blk_bytes(s, d) for s, d in blocks) + (4 << 20)
    budget = _vmem_budget_bytes()
    lim = int(min(max(est, min(32 << 20, budget)), budget))
    return pltpu.CompilerParams(
        dimension_semantics=("parallel",) * num_grid_axes,
        vmem_limit_bytes=lim)


def _pick_row_tile(n, max_tile=4096):
    """Largest pow2 row tile dividing n; prefer >=2 grid steps (megacore)."""
    cands = [p for p in (4096, 2048, 1024, 512, 256, 128, 64, 32, 16, 8)
             if p <= max_tile and n % p == 0]
    for p in cands:
        if n // p >= 2:
            return p
    return cands[0] if cands else n


def _pick_dst_tile(n, per_col_bytes, resident_bytes, budget):
    """Largest dst-column tile (multiple of 128, dividing n, >=2 grid steps)
    whose double-buffered streamed blocks + resident buffers fit the budget."""
    for t in (2048, 1024, 512, 256, 128):
        if n % t == 0 and n // t >= 2:
            if resident_bytes + 2 * t * per_col_bytes + (4 << 20) <= budget:
                return t
    # fall back to the full extent (covers small / non-divisible N).
    return n


# ----------------------------------------------------------------------------
# kernel 1: graph_norm (STD layernorm) + fc + tanh + packed eh/et scores
# ----------------------------------------------------------------------------
def _node_proj_kernel(x_ref, wfc_ref, gna_ref, gnb_ref, watt_ref,
                      feat_ref, sc_ref, *, eps):
    x = x_ref[...]                                       # (tile_n, Fin)
    fin = x.shape[-1]
    mean = jnp.mean(x, axis=-1, keepdims=True)
    # torch.std is unbiased (N-1); eps is added OUTSIDE the sqrt (STDLayerNorm).
    var = jnp.sum((x - mean) ** 2, axis=-1, keepdims=True) / (fin - 1)
    h = gna_ref[...] * (x - mean) / (jnp.sqrt(var) + eps) + gnb_ref[...]

    feat = jnp.dot(h, wfc_ref[...], preferred_element_type=jnp.float32)
    feat_ref[...] = feat                                 # (tile_n, Fout)
    # eh/et via one matmul against a block-diagonal (Fout, 2H) matrix
    # (replaces 2H cross-lane reductions; lands on the otherwise idle MXU).
    sc_ref[...] = jnp.dot(jnp.tanh(feat), watt_ref[...],
                          preferred_element_type=jnp.float32)  # (tile_n, 2H)


# ----------------------------------------------------------------------------
# kernel 2: one PPR hop with the edge softmax recomputed in-kernel (src-major)
# and the MXU matmul flipped: (att_dim, N_src) x (N_src, tile_dst).
# ----------------------------------------------------------------------------
def _hop_kernel(adj_ref, eh_ref, ett_ref, cur_ref, feat0_ref, out_ref, *,
                num_heads, att_dim, alpha, neg_slope, mask_value):
    adj = adj_ref[...]                                   # (N_src, tile_dst) bf16 {0,1}
    edge_mask = adj > 0
    eh = eh_ref[...]                                     # (N_src, H) f32
    ett = ett_ref[...]                                   # (H, tile_dst) f32
    cur = cur_ref[...]                                   # (Fout, N_src) mat dtype
    parts = []
    for hd in range(num_heads):                          # small static loop (H)
        # e[u, v] = LeakyReLU(eh[u] + et[v]); edge softmax over sources u
        # (sublane axis), so no per-head transpose is ever needed.
        logits = eh[:, hd:hd + 1] + ett[hd:hd + 1, :]    # (N_src, tile_dst)
        logits = jnp.where(logits >= 0.0, logits, neg_slope * logits)
        logits = jnp.where(edge_mask, logits, mask_value)
        logits = logits - jnp.max(logits, axis=0, keepdims=True)
        p = jnp.exp(logits)                              # masked edges -> exactly 0
        denom = jnp.sum(p, axis=0, keepdims=True)        # >= 1 (self-loops assumed)
        a = (p * (1.0 / denom)).astype(cur.dtype)        # exact tiny reciprocal
        # flipped MXU orientation: small att_dim on M/sublanes, dst on lanes.
        ch = cur[hd * att_dim:(hd + 1) * att_dim, :]     # (att_dim, N_src)
        parts.append(jnp.dot(ch, a, preferred_element_type=jnp.float32))
    nxt = jnp.concatenate(parts, axis=0)                 # (Fout, tile_dst) f32
    # f32 accumulate-and-blend (only the matmul operands are low precision).
    out_ref[...] = (1.0 - alpha) * nxt + alpha * feat0_ref[...]


# ----------------------------------------------------------------------------
# kernel 3: output projection + residual + ff_norm + FFN + residual
# ----------------------------------------------------------------------------
def _out_ff_kernel(cur_ref, x_ref, wout_ref, ffa_ref, ffb_ref, w1_ref, b1_ref,
                   w2_ref, b2_ref, out_ref, *, eps):
    rst = x_ref[...] + jnp.dot(cur_ref[...], wout_ref[...],
                               preferred_element_type=jnp.float32)
    fo = rst.shape[-1]
    m = jnp.mean(rst, axis=-1, keepdims=True)
    var = jnp.sum((rst - m) ** 2, axis=-1, keepdims=True) / (fo - 1)
    y = ffa_ref[...] * (rst - m) / (jnp.sqrt(var) + eps) + ffb_ref[...]
    hid = jnp.maximum(
        jnp.dot(y, w1_ref[...], preferred_element_type=jnp.float32) + b1_ref[...],
        0.0)
    ff = jnp.dot(hid, w2_ref[...], preferred_element_type=jnp.float32) + b2_ref[...]
    out_ref[...] = rst + ff


# ----------------------------------------------------------------------------
# wrapper
# ----------------------------------------------------------------------------
def magna_forward_pallas(features, adj, params, *, num_heads, hop_num, alpha,
                         eps=1e-6, neg_slope=0.2, mask_value=-1e20,
                         mat_dtype=jnp.bfloat16):
    n, in_feats = features.shape
    out_feats = params["w_fc"].shape[0]
    att_dim = out_feats // num_heads
    d_hidden = params["w1"].shape[0]
    assert in_feats == out_feats, "res_fc is Identity only when in_feats == out_feats"

    x = features.astype(jnp.float32)
    adj_m = adj.astype(jnp.bfloat16)                     # src-major {0,1} mask (no transpose)

    w_fc = params["w_fc"].T.astype(jnp.float32)          # (Fin, Fout)
    w_out = params["w_out"].T.astype(jnp.float32)        # (Fout, Fout)
    gn_a = params["gn_a"].reshape(1, in_feats).astype(jnp.float32)
    gn_b = params["gn_b"].reshape(1, in_feats).astype(jnp.float32)
    ff_a = params["ff_a"].reshape(1, out_feats).astype(jnp.float32)
    ff_b = params["ff_b"].reshape(1, out_feats).astype(jnp.float32)
    w1 = params["w1"].T.astype(jnp.float32)              # (Fout, 4*Fout)
    b1 = params["b1"].reshape(1, -1).astype(jnp.float32)
    w2 = params["w2"].T.astype(jnp.float32)              # (4*Fout, Fout)
    b2 = params["b2"].reshape(1, -1).astype(jnp.float32)

    # block-diagonal (Fout, 2H) matrix so tanh(feat) @ w_att == [eh | et]
    ah = params["attn_h"].reshape(num_heads, att_dim).astype(jnp.float32)
    at = params["attn_t"].reshape(num_heads, att_dim).astype(jnp.float32)
    eye = jnp.eye(num_heads, dtype=jnp.float32)
    blk_h = jnp.einsum('hd,hk->hdk', ah, eye).reshape(out_feats, num_heads)
    blk_t = jnp.einsum('hd,hk->hdk', at, eye).reshape(out_feats, num_heads)
    w_att = jnp.concatenate([blk_h, blk_t], axis=1)      # (Fout, 2H)

    # ---- kernel 1: per-node projection + packed attention scores ------------
    tile_n = _pick_row_tile(n)
    n_row_tiles = n // tile_n
    k1 = functools.partial(_node_proj_kernel, eps=eps)
    feat, scores = pl.pallas_call(
        k1,
        grid=(n_row_tiles,),
        in_specs=[
            pl.BlockSpec((tile_n, in_feats), lambda i: (i, 0)),
            pl.BlockSpec((in_feats, out_feats), lambda i: (0, 0)),
            pl.BlockSpec((1, in_feats), lambda i: (0, 0)),
            pl.BlockSpec((1, in_feats), lambda i: (0, 0)),
            pl.BlockSpec((out_feats, 2 * num_heads), lambda i: (0, 0)),
        ],
        out_specs=[
            pl.BlockSpec((tile_n, out_feats), lambda i: (i, 0)),
            pl.BlockSpec((tile_n, 2 * num_heads), lambda i: (i, 0)),
        ],
        out_shape=[
            jax.ShapeDtypeStruct((n, out_feats), jnp.float32),
            jax.ShapeDtypeStruct((n, 2 * num_heads), jnp.float32),
        ],
        compiler_params=_cparams(1, [
            ((tile_n, in_feats), jnp.float32),
            ((in_feats, out_feats), jnp.float32),
            ((out_feats, 2 * num_heads), jnp.float32),
            ((tile_n, out_feats), jnp.float32),
            ((tile_n, 2 * num_heads), jnp.float32),
        ]),
    )(x, w_fc, gn_a, gn_b, w_att)

    # Tiny (N, <=32)-sized host transposes: features to (Fout, N) for the
    # flipped hop matmul LHS, tail scores to (H, N) for lane-axis broadcast.
    feat_t = feat.T                                       # (Fout, N) f32
    eh = scores[:, :num_heads]                            # (N, H)  f32
    et_t = scores[:, num_heads:].T                        # (H, N)  f32

    # ---- kernel 2: fused edge-softmax recompute + flipped PPR hop -----------
    budget = _vmem_budget_bytes()
    mat_bytes = np.dtype(mat_dtype).itemsize
    per_col = 2 * n + 4 * num_heads + 8 * out_feats       # adj + ett + feat0 + out per dst col
    resident = 2 * (4 * n * num_heads + mat_bytes * out_feats * n)  # eh + cur
    tile_dst = _pick_dst_tile(n, per_col, resident, budget)
    n_dst_tiles = n // tile_dst

    hop_fn = functools.partial(_hop_kernel, num_heads=num_heads,
                               att_dim=att_dim, alpha=alpha,
                               neg_slope=neg_slope, mask_value=mask_value)
    hop_call = pl.pallas_call(
        hop_fn,
        grid=(n_dst_tiles,),
        in_specs=[
            pl.BlockSpec((n, tile_dst), lambda i: (0, i)),           # adjacency cols
            pl.BlockSpec((n, num_heads), lambda i: (0, 0)),          # eh (resident)
            pl.BlockSpec((num_heads, tile_dst), lambda i: (0, i)),   # et^T cols
            pl.BlockSpec((out_feats, n), lambda i: (0, 0)),          # cur^T (resident)
            pl.BlockSpec((out_feats, tile_dst), lambda i: (0, i)),   # feat0^T cols
        ],
        out_specs=pl.BlockSpec((out_feats, tile_dst), lambda i: (0, i)),
        out_shape=jax.ShapeDtypeStruct((out_feats, n), jnp.float32),
        compiler_params=_cparams(1, [
            ((n, tile_dst), jnp.bfloat16),
            ((n, num_heads), jnp.float32),
            ((num_heads, tile_dst), jnp.float32),
            ((out_feats, n), mat_dtype),
            ((out_feats, tile_dst), jnp.float32),
            ((out_feats, tile_dst), jnp.float32),
        ]),
    )

    cur_t = feat_t
    for _ in range(hop_num):   # hop_num is a small static int; full sync per hop
        # cast the matmul operand once per hop (wrapper-side); the blend stays f32
        cur_t = hop_call(adj_m, eh, et_t, cur_t.astype(mat_dtype), feat_t)

    cur = cur_t.T                                         # (N, Fout) f32, tiny

    # ---- kernel 3: fc_out + residual + ff_norm + FFN + residual -------------
    k3 = functools.partial(_out_ff_kernel, eps=eps)
    out = pl.pallas_call(
        k3,
        grid=(n_row_tiles,),
        in_specs=[
            pl.BlockSpec((tile_n, out_feats), lambda i: (i, 0)),
            pl.BlockSpec((tile_n, in_feats), lambda i: (i, 0)),
            pl.BlockSpec((out_feats, out_feats), lambda i: (0, 0)),
            pl.BlockSpec((1, out_feats), lambda i: (0, 0)),
            pl.BlockSpec((1, out_feats), lambda i: (0, 0)),
            pl.BlockSpec((out_feats, d_hidden), lambda i: (0, 0)),
            pl.BlockSpec((1, d_hidden), lambda i: (0, 0)),
            pl.BlockSpec((d_hidden, out_feats), lambda i: (0, 0)),
            pl.BlockSpec((1, out_feats), lambda i: (0, 0)),
        ],
        out_specs=pl.BlockSpec((tile_n, out_feats), lambda i: (i, 0)),
        out_shape=jax.ShapeDtypeStruct((n, out_feats), jnp.float32),
        compiler_params=_cparams(1, [
            ((tile_n, out_feats), jnp.float32),
            ((out_feats, d_hidden), jnp.float32),
            ((d_hidden, out_feats), jnp.float32),
            ((tile_n, d_hidden), jnp.float32),
        ]),
    )(cur, x, w_out, ff_a, ff_b, w1, b1, w2, b2)
    return out


# ----------------------------------------------------------------------------
# pure-JAX reference (same dense-graph semantics as the torch module)
# ----------------------------------------------------------------------------
def magna_forward_ref(features, adj, params, *, num_heads, hop_num, alpha,
                      eps=1e-6, neg_slope=0.2, mask_value=-1e20):
    hp = jax.lax.Precision.HIGHEST
    x = features
    n, fin = x.shape
    mean = x.mean(-1, keepdims=True)
    std = jnp.sqrt(jnp.sum((x - mean) ** 2, -1, keepdims=True) / (fin - 1))
    h = params["gn_a"] * (x - mean) / (std + eps) + params["gn_b"]
    feat = jnp.dot(h, params["w_fc"].T, precision=hp)
    H = num_heads
    D = feat.shape[-1] // H
    ft = jnp.tanh(feat).reshape(n, H, D)
    eh = (ft * params["attn_h"]).sum(-1)
    et = (ft * params["attn_t"]).sum(-1)
    logits = eh[:, None, :] + et[None, :, :]               # (src, dst, H)
    logits = jnp.where(logits >= 0, logits, neg_slope * logits)
    logits = jnp.where(adj[:, :, None] > 0, logits, mask_value)
    a = jax.nn.softmax(logits, axis=0)
    a = jnp.where(adj[:, :, None] > 0, a, 0.0)
    feat3 = feat.reshape(n, H, D)
    cur = feat3
    for _ in range(hop_num):
        nxt = jnp.einsum('uvh,uhd->vhd', a, cur, precision=hp)
        cur = (1.0 - alpha) * nxt + alpha * feat3
    rst = jnp.dot(cur.reshape(n, H * D), params["w_out"].T, precision=hp)
    rst = features + rst
    fo = rst.shape[-1]
    m2 = rst.mean(-1, keepdims=True)
    s2 = jnp.sqrt(jnp.sum((rst - m2) ** 2, -1, keepdims=True) / (fo - 1))
    y = params["ff_a"] * (rst - m2) / (s2 + eps) + params["ff_b"]
    hid = jnp.maximum(jnp.dot(y, params["w1"].T, precision=hp) + params["b1"], 0.0)
    ff = jnp.dot(hid, params["w2"].T, precision=hp) + params["b2"]
    return rst + ff


def _xavier_normal(key, shape, gain):
    fan_out, fan_in = shape[0], shape[1]
    std = gain * math.sqrt(2.0 / (fan_in + fan_out))
    return std * jax.random.normal(key, shape, jnp.float32)


if __name__ == "__main__":
    # small shapes consistent with the module
    N, in_feats, hidden_dim, num_heads = 16, 32, 32, 4
    att_dim = hidden_dim // num_heads
    hop_num, alpha = 3, 0.15

    key = jax.random.PRNGKey(0)
    ks = jax.random.split(key, 12)

    features = jax.random.normal(ks[0], (N, in_feats), jnp.float32)
    # deterministic random graph with self-loops (every dst has >=1 incoming edge)
    adj = (jax.random.uniform(ks[1], (N, N)) < 0.3).astype(jnp.float32)
    adj = jnp.maximum(adj, jnp.eye(N, dtype=jnp.float32))

    gain_tanh = 5.0 / 3.0
    gain_relu = math.sqrt(2.0)
    attn_std = gain_tanh * math.sqrt(2.0 / (num_heads * att_dim + att_dim))

    params = dict(
        w_fc=_xavier_normal(ks[2], (hidden_dim, in_feats), gain_tanh),
        w_out=_xavier_normal(ks[3], (hidden_dim, hidden_dim), gain_tanh),
        attn_h=attn_std * jax.random.normal(ks[4], (1, num_heads, att_dim), jnp.float32),
        attn_t=attn_std * jax.random.normal(ks[5], (1, num_heads, att_dim), jnp.float32),
        gn_a=jnp.ones((in_feats,), jnp.float32),
        gn_b=jnp.zeros((in_feats,), jnp.float32),
        ff_a=jnp.ones((hidden_dim,), jnp.float32),
        ff_b=jnp.zeros((hidden_dim,), jnp.float32),
        w1=_xavier_normal(ks[6], (4 * hidden_dim, hidden_dim), gain_relu),
        b1=0.01 * jax.random.normal(ks[7], (4 * hidden_dim,), jnp.float32),
        w2=_xavier_normal(ks[8], (hidden_dim, 4 * hidden_dim), gain_relu),
        b2=0.01 * jax.random.normal(ks[9], (hidden_dim,), jnp.float32),
    )

    ref = magna_forward_ref(features, adj, params, num_heads=num_heads,
                            hop_num=hop_num, alpha=alpha)

    # (1) f32 matmul path: tight-ish check (default MXU precision accounts for
    #     the tolerance).
    out_f32 = magna_forward_pallas(features, adj, params, num_heads=num_heads,
                                   hop_num=hop_num, alpha=alpha,
                                   mat_dtype=jnp.float32)
    out_f32 = jax.block_until_ready(out_f32)
    err_f32 = float(jnp.max(jnp.abs(out_f32 - ref)))
    if not bool(jnp.allclose(out_f32, ref, atol=3e-2, rtol=3e-2)):
        raise SystemExit(f"f32 path mismatch vs reference: max abs err = {err_f32}")

    # (2) default bf16 matmul-operand path (faster MXU, half the VMEM/HBM for
    #     the resident cur buffer); looser tolerance.
    out_bf16 = magna_forward_pallas(features, adj, params, num_heads=num_heads,
                                    hop_num=hop_num, alpha=alpha)
    out_bf16 = jax.block_until_ready(out_bf16)
    err_bf16 = float(jnp.max(jnp.abs(out_bf16 - ref)))
    if not bool(jnp.allclose(out_bf16, ref, atol=1.5e-1, rtol=1.5e-1)):
        raise SystemExit(f"bf16 path mismatch vs reference: max abs err = {err_bf16}")

    print("KERNEL_OK")
</pallas_src>

<mosaic_0001>
module attributes {stable_mosaic.version = 11 : i64} {
  func.func @_node_proj_kernel(%arg0: i32, %arg1: memref<8x32xf32, #tpu.memory_space<vmem>>, %arg2: memref<32x32xf32, #tpu.memory_space<vmem>>, %arg3: memref<1x32xf32, #tpu.memory_space<vmem>>, %arg4: memref<1x32xf32, #tpu.memory_space<vmem>>, %arg5: memref<32x8xf32, #tpu.memory_space<vmem>>, %arg6: memref<8x32xf32, #tpu.memory_space<vmem>>, %arg7: memref<8x8xf32, #tpu.memory_space<vmem>>) attributes {dimension_semantics = [#tpu.dimension_semantics<parallel>], iteration_bounds = array<i64: 2>, scalar_prefetch = 0 : i64, scratch_operands = 0 : i64, tpu.core_type = #tpu.core_type<tc>, window_params = [{transform_indices = @transform_0, window_bounds = array<i64: 8, 32>}, {pipeline_mode = #tpu.pipeline_mode<synchronous>, transform_indices = @transform_1, window_bounds = array<i64: 32, 32>}, {pipeline_mode = #tpu.pipeline_mode<synchronous>, transform_indices = @transform_2, window_bounds = array<i64: 1, 32>}, {pipeline_mode = #tpu.pipeline_mode<synchronous>, transform_indices = @transform_3, window_bounds = array<i64: 1, 32>}, {pipeline_mode = #tpu.pipeline_mode<synchronous>, transform_indices = @transform_4, window_bounds = array<i64: 32, 8>}, {transform_indices = @transform_5, window_bounds = array<i64: 8, 32>}, {transform_indices = @transform_6, window_bounds = array<i64: 8, 8>}]} {
    %c0 = arith.constant 0 : index
    %c0_0 = arith.constant 0 : index
    %0 = vector.load %arg1[%c0, %c0_0] : memref<8x32xf32, #tpu.memory_space<vmem>>, vector<8x32xf32>
    %cst = arith.constant dense<0.000000e+00> : vector<8xf32>
    %1 = vector.multi_reduction <add>, %0, %cst [1] : vector<8x32xf32> to vector<8xf32>
    %2 = vector.shape_cast %1 : vector<8xf32> to vector<8x1xf32>
    %cst_1 = arith.constant 3.200000e+01 : f32
    %3 = vector.broadcast %cst_1 : f32 to vector<8x1xf32>
    %4 = arith.divf %2, %3 : vector<8x1xf32>
    %5 = vector.broadcast %4 : vector<8x1xf32> to vector<8x32xf32>
    %6 = arith.subf %0, %5 : vector<8x32xf32>
    %7 = arith.mulf %6, %6 : vector<8x32xf32>
    %cst_2 = arith.constant dense<0.000000e+00> : vector<8xf32>
    %8 = vector.multi_reduction <add>, %7, %cst_2 [1] : vector<8x32xf32> to vector<8xf32>
    %9 = vector.shape_cast %8 : vector<8xf32> to vector<8x1xf32>
    %cst_3 = arith.constant 3.100000e+01 : f32
    %10 = vector.broadcast %cst_3 : f32 to vector<8x1xf32>
    %11 = arith.divf %9, %10 : vector<8x1xf32>
    %c0_4 = arith.constant 0 : index
    %c0_5 = arith.constant 0 : index
    %12 = vector.load %arg3[%c0_4, %c0_5] : memref<1x32xf32, #tpu.memory_space<vmem>>, vector<1x32xf32>
    %13 = vector.broadcast %4 : vector<8x1xf32> to vector<8x32xf32>
    %14 = arith.subf %0, %13 : vector<8x32xf32>
    %15 = vector.broadcast %12 : vector<1x32xf32> to vector<8x32xf32>
    %16 = arith.mulf %15, %14 : vector<8x32xf32>
    %17 = math.sqrt %11 : vector<8x1xf32>
    %cst_6 = arith.constant 9.99999997E-7 : f32
    %18 = vector.broadcast %cst_6 : f32 to vector<8x1xf32>
    %19 = arith.addf %17, %18 : vector<8x1xf32>
    %20 = vector.broadcast %19 : vector<8x1xf32> to vector<8x32xf32>
    %21 = arith.divf %16, %20 : vector<8x32xf32>
    %c0_7 = arith.constant 0 : index
    %c0_8 = arith.constant 0 : index
    %22 = vector.load %arg4[%c0_7, %c0_8] : memref<1x32xf32, #tpu.memory_space<vmem>>, vector<1x32xf32>
    %23 = vector.broadcast %22 : vector<1x32xf32> to vector<8x32xf32>
    %24 = arith.addf %21, %23 : vector<8x32xf32>
    %c0_9 = arith.constant 0 : index
    %c0_10 = arith.constant 0 : index
    %25 = vector.load %arg2[%c0_9, %c0_10] : memref<32x32xf32, #tpu.memory_space<vmem>>, vector<32x32xf32>
    %cst_11 = arith.constant dense<0.000000e+00> : vector<8x32xf32>
    %26 = tpu.matmul %24, %25, %cst_11 {dimension_numbers = #tpu.dot_dimension_numbers<[1], [0], [0], [1], [0, 0, 1, 1], [], []>} : vector<8x32xf32>, vector<32x32xf32>, vector<8x32xf32> -> vector<8x32xf32>
    %c0_12 = arith.constant 0 : index
    %c0_13 = arith.constant 0 : index
    %27 = vector.load %arg6[%c0_12, %c0_13] : memref<8x32xf32, #tpu.memory_space<vmem>>, vector<8x32xf32>
    tpu.vector_store %arg6[%c0_12, %c0_13], %26 {strides = array<i32>} : memref<8x32xf32, #tpu.memory_space<vmem>>, vector<8x32xf32>,
    %28 = math.tanh %26 : vector<8x32xf32>
    %c0_14 = arith.constant 0 : index
    %c0_15 = arith.constant 0 : index
    %29 = vector.load %arg5[%c0_14, %c0_15] : memref<32x8xf32, #tpu.memory_space<vmem>>, vector<32x8xf32>
    %cst_16 = arith.constant dense<0.000000e+00> : vector<8x8xf32>
    %30 = tpu.matmul %28, %29, %cst_16 {dimension_numbers = #tpu.dot_dimension_numbers<[1], [0], [0], [1], [0, 0, 1, 1], [], []>} : vector<8x32xf32>, vector<32x8xf32>, vector<8x8xf32> -> vector<8x8xf32>
    %c0_17 = arith.constant 0 : index
    %c0_18 = arith.constant 0 : index
    %31 = vector.load %arg7[%c0_17, %c0_18] : memref<8x8xf32, #tpu.memory_space<vmem>>, vector<8x8xf32>
    tpu.vector_store %arg7[%c0_17, %c0_18], %30 {strides = array<i32>} : memref<8x8xf32, #tpu.memory_space<vmem>>, vector<8x8xf32>,
    return
  }
  func.func @transform_0(%arg0: i32) -> (i32, i32) {
    %c0_i32 = arith.constant 0 : i32
    %c0_i32_0 = arith.constant 0 : i32
    return %arg0, %c0_i32 : i32, i32
  }
  func.func @transform_1(%arg0: i32) -> (i32, i32) {
    %c0_i32 = arith.constant 0 : i32
    %c0_i32_0 = arith.constant 0 : i32
    %c0_i32_1 = arith.constant 0 : i32
    return %c0_i32, %c0_i32_0 : i32, i32
  }
  func.func @transform_2(%arg0: i32) -> (i32, i32) {
    %c0_i32 = arith.constant 0 : i32
    %c0_i32_0 = arith.constant 0 : i32
    %c0_i32_1 = arith.constant 0 : i32
    return %c0_i32, %c0_i32_0 : i32, i32
  }
  func.func @transform_3(%arg0: i32) -> (i32, i32) {
    %c0_i32 = arith.constant 0 : i32
    %c0_i32_0 = arith.constant 0 : i32
    %c0_i32_1 = arith.constant 0 : i32
    return %c0_i32, %c0_i32_0 : i32, i32
  }
  func.func @transform_4(%arg0: i32) -> (i32, i32) {
    %c0_i32 = arith.constant 0 : i32
    %c0_i32_0 = arith.constant 0 : i32
    %c0_i32_1 = arith.constant 0 : i32
    return %c0_i32, %c0_i32_0 : i32, i32
  }
  func.func @transform_5(%arg0: i32) -> (i32, i32) {
    %c0_i32 = arith.constant 0 : i32
    %c0_i32_0 = arith.constant 0 : i32
    return %arg0, %c0_i32 : i32, i32
  }
  func.func @transform_6(%arg0: i32) -> (i32, i32) {
    %c0_i32 = arith.constant 0 : i32
    %c0_i32_0 = arith.constant 0 : i32
    return %arg0, %c0_i32 : i32, i32
  }
}

</mosaic_0001>

<llo_original>
// kernel: tpu_custom_call.1
$region0: #{tpu_custom_call.1}
  #allocation0 [shape = 'u32[]', space=smem, size = 0x4, offset = 0x4, fixed_abs, tag = 'smem constant byte address 0x4 - core index']
  #allocation1 [shape = 'u32[72,128]{1,0:T(1,128)}', space=vmem, size = 0x9000, scoped, tag = 'internal scratch']
  %s0 = inlined_call_operand.hbm [shape: f32[16,32], index: 0, kind: input, shape index: {}]
  %s1 = inlined_call_operand.vmem [shape: f32[32,32], index: 1, kind: input, shape index: {}]
  %s2 = inlined_call_operand.vmem [shape: f32[1,32], index: 2, kind: input, shape index: {}]
  %s3 = inlined_call_operand.vmem [shape: f32[1,32], index: 3, kind: input, shape index: {}]
  %s4 = inlined_call_operand.vmem [shape: f32[32,8], index: 4, kind: input, shape index: {}]
  %s5 = inlined_call_operand.hbm [shape: f32[16,32], index: 5, kind: output, shape index: {0}]
  %s6 = inlined_call_operand.vmem [shape: f32[16,8], index: 6, kind: output, shape index: {1}]
  %7 = xla_tuple %s5, %s6
  %s8 = sld [smem:[#allocation0]]
  $region65: #{tpu_custom_call.1} parent=0
    _
  %s10 = ssub.s32 1, %s8
  %s11 = scalar_select 0, %s10, %s8
  $region1: #{tpu_custom_call.1} parent=0
    #allocation2 [shape = 'u8[8192]{0}', space=vmem, size = 0x2000, scoped, tag = 'input window, operand 0']
    #allocation3 [shape = 's32[2]{0}', space=sflag, size = 0x8, scoped, tag = 'scoped memory for tpu_custom_call.1']
    #allocation4 [shape = 's32[2]{0}', space=sflag, size = 0x8, scoped, tag = 'scoped memory for tpu_custom_call.1']
    #allocation5 [shape = 'u8[8192]{0}', space=vmem, size = 0x2000, scoped, tag = 'output window, operand 0']
    %12 = vsyncpa [#allocation3], 0
    %s13 = scalar_lea.sflag [#allocation3], 1
    %14 = vsyncpa %s13, 0
    %15 = vsyncpa [#allocation4], 0
    %s16 = scalar_lea.sflag [#allocation4], 1
    %17 = vsyncpa %s16, 0
    loop: start=0, step=1, limit=4
    $region2: #{tpu_custom_call.1} parent=1 // loop_pre_header
      _
    $region3: #{tpu_custom_call.1} parent=1 // loop_header
      %s19 = sphi 0, %s23
      %p20 = scmp.ge.s32.totalorder %s19, 4
      %s29 = sphi 0, %s31
      %s32 = sphi 0, %s29
      %s33 = sphi 0, %s32
      %s49 = sphi 0, %s33
      %s53 = sphi 0, %s53
      %s55 = sphi 0, %s53
      %s56 = sphi 0, %s55
      %s70 = sphi 0, %s56
      %s74 = sphi 0, %s74
      %s76 = sphi 0, %s74
      %s77 = sphi 0, %s76
      %s91 = sphi 0, %s77
      %s95 = sphi 0, %s95
      %s97 = sphi 0, %s95
      %s98 = sphi 0, %s97
      %s112 = sphi 0, %s98
      %s116 = sphi 0, %s116
      %s118 = sphi 0, %s116
      %s119 = sphi 0, %s118
      %s133 = sphi 0, %s119
      %s139 = sphi 0, %s141
      %s142 = sphi 0, %s139
      %s143 = sphi 0, %s142
      %s159 = sphi 0, %s143
      %s165 = sphi 0, %s167
      %s168 = sphi 0, %s165
      %s169 = sphi 0, %s168
      %s185 = sphi 0, %s169
    $region4: #{tpu_custom_call.1} parent=1 // loop_header_branch
      %22 = sbr.rel (%p20) target = $region8
    $region5: #{tpu_custom_call.1} parent=1 // loop_body
      %s24 = ssub.s32 %s19, 1
      %s25 = ssub.s32 %s19, 2
      %s26 = sadd.s32 %s19, 1
      %s27 = ssub.s32 %s19, %s26
      %p28 = scmp.eq.s32.totalorder %s27, 0
      %s30 = sadd.s32 %s29, 1
      %s31 = scalar_select %p28, %s29, %s30
      %p34 = pneg %p28
      %p35 = scmp.eq.s32.totalorder %s19, 1
      %p36 = por %p34, %p35
      %p37 = scmp.ne.s32.totalorder %s29, %s32
      %p38 = scmp.eq.s32.totalorder %s19, 0
      %p39 = por %p37, %p38
      %p40 = scmp.ne.s32.totalorder %s29, %s32
      %p41 = scmp.eq.s32.totalorder %s24, 1
      %p42 = por %p40, %p41
      %p43 = scmp.ne.s32.totalorder %s32, %s33
      %p44 = scmp.eq.s32.totalorder %s24, 0
      %p45 = por %p43, %p44
      %p46 = scmp.ne.s32.totalorder %s32, %s33
      %p47 = scmp.eq.s32.totalorder %s25, 1
      %p48 = por %p46, %p47
      %p50 = scmp.ne.s32.totalorder %s33, %s49
      %p51 = scmp.eq.s32.totalorder %s25, 0
      %p52 = por %p50, %p51
      %s54 = sadd.s32 %s53, 1
      %p57 = scmp.eq.s32.totalorder %s19, 1
      %p58 = scmp.ne.s32.totalorder %s53, %s55
      %p59 = scmp.eq.s32.totalorder %s19, 0
      %p60 = por %p58, %p59
      %p61 = scmp.ne.s32.totalorder %s53, %s55
      %p62 = scmp.eq.s32.totalorder %s24, 1
      %p63 = por %p61, %p62
      %p64 = scmp.ne.s32.totalorder %s55, %s56
      %p65 = scmp.eq.s32.totalorder %s24, 0
      %p66 = por %p64, %p65
      %p67 = scmp.ne.s32.totalorder %s55, %s56
      %p68 = scmp.eq.s32.totalorder %s25, 1
      %p69 = por %p67, %p68
      %p71 = scmp.ne.s32.totalorder %s56, %s70
      %p72 = scmp.eq.s32.totalorder %s25, 0
      %p73 = por %p71, %p72
      %s75 = sadd.s32 %s74, 1
      %p78 = scmp.eq.s32.totalorder %s19, 1
      %p79 = scmp.ne.s32.totalorder %s74, %s76
      %p80 = scmp.eq.s32.totalorder %s19, 0
      %p81 = por %p79, %p80
      %p82 = scmp.ne.s32.totalorder %s74, %s76
      %p83 = scmp.eq.s32.totalorder %s24, 1
      %p84 = por %p82, %p83
      %p85 = scmp.ne.s32.totalorder %s76, %s77
      %p86 = scmp.eq.s32.totalorder %s24, 0
      %p87 = por %p85, %p86
      %p88 = scmp.ne.s32.totalorder %s76, %s77
      %p89 = scmp.eq.s32.totalorder %s25, 1
      %p90 = por %p88, %p89
      %p92 = scmp.ne.s32.totalorder %s77, %s91
      %p93 = scmp.eq.s32.totalorder %s25, 0
      %p94 = por %p92, %p93
      %s96 = sadd.s32 %s95, 1
      %p99 = scmp.eq.s32.totalorder %s19, 1
      %p100 = scmp.ne.s32.totalorder %s95, %s97
      %p101 = scmp.eq.s32.totalorder %s19, 0
      %p102 = por %p100, %p101
      %p103 = scmp.ne.s32.totalorder %s95, %s97
      %p104 = scmp.eq.s32.totalorder %s24, 1
      %p105 = por %p103, %p104
      %p106 = scmp.ne.s32.totalorder %s97, %s98
      %p107 = scmp.eq.s32.totalorder %s24, 0
      %p108 = por %p106, %p107
      %p109 = scmp.ne.s32.totalorder %s97, %s98
      %p110 = scmp.eq.s32.totalorder %s25, 1
      %p111 = por %p109, %p110
      %p113 = scmp.ne.s32.totalorder %s98, %s112
      %p114 = scmp.eq.s32.totalorder %s25, 0
      %p115 = por %p113, %p114
      %s117 = sadd.s32 %s116, 1
      %p120 = scmp.eq.s32.totalorder %s19, 1
      %p121 = scmp.ne.s32.totalorder %s116, %s118
      %p122 = scmp.eq.s32.totalorder %s19, 0
      %p123 = por %p121, %p122
      %p124 = scmp.ne.s32.totalorder %s116, %s118
      %p125 = scmp.eq.s32.totalorder %s24, 1
      %p126 = por %p124, %p125
      %p127 = scmp.ne.s32.totalorder %s118, %s119
      %p128 = scmp.eq.s32.totalorder %s24, 0
      %p129 = por %p127, %p128
      %p130 = scmp.ne.s32.totalorder %s118, %s119
      %p131 = scmp.eq.s32.totalorder %s25, 1
      %p132 = por %p130, %p131
      %p134 = scmp.ne.s32.totalorder %s119, %s133
      %p135 = scmp.eq.s32.totalorder %s25, 0
      %p136 = por %p134, %p135
      %s137 = ssub.s32 %s19, %s26
      %p138 = scmp.eq.s32.totalorder %s137, 0
      %s140 = sadd.s32 %s139, 1
      %s141 = scalar_select %p138, %s139, %s140
      %p144 = pneg %p138
      %p145 = scmp.eq.s32.totalorder %s19, 1
      %p146 = por %p144, %p145
      %p147 = scmp.ne.s32.totalorder %s139, %s142
      %p148 = scmp.eq.s32.totalorder %s19, 0
      %p149 = por %p147, %p148
      %p150 = scmp.ne.s32.totalorder %s139, %s142
      %p151 = scmp.eq.s32.totalorder %s24, 1
      %p152 = por %p150, %p151
      %p153 = scmp.ne.s32.totalorder %s142, %s143
      %p154 = scmp.eq.s32.totalorder %s24, 0
      %p155 = por %p153, %p154
      %p156 = scmp.ne.s32.totalorder %s142, %s143
      %p157 = scmp.eq.s32.totalorder %s25, 1
      %p158 = por %p156, %p157
      %p160 = scmp.ne.s32.totalorder %s143, %s159
      %p161 = scmp.eq.s32.totalorder %s25, 0
      %p162 = por %p160, %p161
      %s163 = ssub.s32 %s19, %s26
      %p164 = scmp.eq.s32.totalorder %s163, 0
      %s166 = sadd.s32 %s165, 1
      %s167 = scalar_select %p164, %s165, %s166
      %p170 = pneg %p164
      %p171 = scmp.eq.s32.totalorder %s19, 1
      %p172 = por %p170, %p171
      %p173 = scmp.ne.s32.totalorder %s165, %s168
      %p174 = scmp.eq.s32.totalorder %s19, 0
      %p175 = por %p173, %p174
      %p176 = scmp.ne.s32.totalorder %s165, %s168
      %p177 = scmp.eq.s32.totalorder %s24, 1
      %p178 = por %p176, %p177
      %p179 = scmp.ne.s32.totalorder %s168, %s169
      %p180 = scmp.eq.s32.totalorder %s24, 0
      %p181 = por %p179, %p180
      %p182 = scmp.ne.s32.totalorder %s168, %s169
      %p183 = scmp.eq.s32.totalorder %s25, 1
      %p184 = por %p182, %p183
      %p186 = scmp.ne.s32.totalorder %s169, %s185
      %p187 = scmp.eq.s32.totalorder %s25, 0
      %p188 = por %p186, %p187
      %p189 = scmp.le.s32.totalorder 1, %s19
      %p190 = scmp.lt.s32.totalorder %s19, 3
      %p191 = pnand %p189, %p190
      %p192 = pneg %p191
      // Predicated region
      $region9: #{tpu_custom_call.1} parent=5 // pred_check
        _
      $region10: #{tpu_custom_call.1} parent=5 // pred_check_branch
        %194 = sbr.rel (%p191) target = $region12
      $region11: #{tpu_custom_call.1} parent=5 // pred_region
        %s195 = ssub.s32 %s19, 1
        // Predicated region
        $region13: #{tpu_custom_call.1} parent=11 // pred_check
          %p196 = pneg %p66
        $region14: #{tpu_custom_call.1} parent=11 // pred_check_branch
          %198 = sbr.rel (%p196) target = $region16
        $region15: #{tpu_custom_call.1} parent=11 // pred_region
          _
        $region16: #{tpu_custom_call.1} parent=11 // pred_fallthru
          _
        // Predicated region
        $region17: #{tpu_custom_call.1} parent=11 // pred_check
          %p199 = pneg %p87
        $region18: #{tpu_custom_call.1} parent=11 // pred_check_branch
          %201 = sbr.rel (%p199) target = $region20
        $region19: #{tpu_custom_call.1} parent=11 // pred_region
          _
        $region20: #{tpu_custom_call.1} parent=11 // pred_fallthru
          _
        // Predicated region
        $region21: #{tpu_custom_call.1} parent=11 // pred_check
          %p202 = pneg %p108
        $region22: #{tpu_custom_call.1} parent=11 // pred_check_branch
          %204 = sbr.rel (%p202) target = $region24
        $region23: #{tpu_custom_call.1} parent=11 // pred_region
          _
        $region24: #{tpu_custom_call.1} parent=11 // pred_fallthru
          _
        // Predicated region
        $region25: #{tpu_custom_call.1} parent=11 // pred_check
          %p205 = pneg %p129
        $region26: #{tpu_custom_call.1} parent=11 // pred_check_branch
          %207 = sbr.rel (%p205) target = $region28
        $region27: #{tpu_custom_call.1} parent=11 // pred_region
          _
        $region28: #{tpu_custom_call.1} parent=11 // pred_fallthru
          _
      $region12: #{tpu_custom_call.1} parent=5 // pred_fallthru
        _
      %p208 = scmp.lt.s32.totalorder %s19, 2
      // Predicated region
      $region29: #{tpu_custom_call.1} parent=5 // pred_check
        %p209 = pneg %p208
      $region30: #{tpu_custom_call.1} parent=5 // pred_check_branch
        %211 = sbr.rel (%p209) target = $region32
      $region31: #{tpu_custom_call.1} parent=5 // pred_region
        // Predicated region
        $region33: #{tpu_custom_call.1} parent=31 // pred_check
          %p212 = pneg %p39
        $region34: #{tpu_custom_call.1} parent=31 // pred_check_branch
          %214 = sbr.rel (%p212) target = $region36
        $region35: #{tpu_custom_call.1} parent=31 // pred_region
          %s215 = sand.u32 %s29, 1
          %s216 = scalar_lea.sflag [#allocation3], %s215
          %s217 = sand.u32 %s29, 1
          %s218 = smul.addr %s217, 8
          %s219 = scalar_lea.vmem [#allocation2], %s218
          %221 = vsyncadd %s216, 0
          %s222 = smul.addr %s19, 8
          %s223 = scalar_lea.hbm %s0, %s222
          %s225 = sshll.u32 %s223, 4
          %s226 = int_to_ptr.hbm [resolvable:$true] %s225
          %s227 = sshll.u32 %s219, 4
          %s228 = int_to_ptr.vmem [resolvable:$true] %s227
          %230 = dma.hbm_to_vmem [thread:$0]  %s226, 128, %s228, %s216
        $region36: #{tpu_custom_call.1} parent=31 // pred_fallthru
          _
      $region32: #{tpu_custom_call.1} parent=5 // pred_fallthru
        _
      %p231 = scmp.le.s32.totalorder 1, %s19
      %p232 = scmp.lt.s32.totalorder %s19, 3
      %p233 = pnand %p231, %p232
      %p234 = pneg %p233
      // Predicated region
      $region37: #{tpu_custom_call.1} parent=5 // pred_check
        _
      $region38: #{tpu_custom_call.1} parent=5 // pred_check_branch
        %236 = sbr.rel (%p233) target = $region40
      $region39: #{tpu_custom_call.1} parent=5 // pred_region
        %s237 = ssub.s32 %s19, 1
        %s238 = sand.u32 %s32, 1
        %s239 = scalar_lea.sflag [#allocation3], %s238
        %s240 = sand.u32 %s32, 1
        %s241 = smul.addr %s240, 8
        %s242 = scalar_lea.vmem [#allocation2], %s241
        // Predicated region
        $region41: #{tpu_custom_call.1} parent=39 // pred_check
          %p243 = pneg %p45
        $region42: #{tpu_custom_call.1} parent=39 // pred_check_branch
          %245 = sbr.rel (%p243) target = $region44
        $region43: #{tpu_custom_call.1} parent=39 // pred_region
          %247 = dma.done %s239, 128
        $region44: #{tpu_custom_call.1} parent=39 // pred_fallthru
          _
        %s248 = sand.u32 %s32, 1
        %s249 = scalar_lea.sflag [#allocation3], %s248
        %s250 = sand.u32 %s32, 1
        %s251 = smul.addr %s250, 8
        %s252 = scalar_lea.vmem [#allocation2], %s251
        %p253 = pneg %p45
        %p254 = pneg %p42
        %p255 = pneg %p66
        %p256 = pneg %p63
        %p257 = pneg %p87
        %p258 = pneg %p84
        %p259 = pneg %p108
        %p260 = pneg %p105
        %p261 = pneg %p129
        %p262 = pneg %p126
        %p263 = pneg %p155
        %p264 = pneg %p152
        %s265 = sand.u32 %s142, 1
        %s266 = scalar_lea.sflag [#allocation4], %s265
        %s267 = sand.u32 %s142, 1
        %s268 = smul.addr %s267, 8
        %s269 = scalar_lea.vmem [#allocation5], %s268
        %p270 = pneg %p181
        %p271 = pneg %p178
        %p272 = scmp.lt.s32.totalorder %s24, 1
        %s273 = scalar_select %p272, %s24, 1
        %s274 = smul.addr %s273, 8
        %s275 = scalar_lea.vmem %s6, %s274
        %p276 = scmp.lt.s32.totalorder %s24, 1
        %s277 = scalar_select %p276, %s24, 1
        %s278 = smul.addr %s277, 8
        %s279 = scalar_lea.vmem %s6, %s278
        %v280 = vld [vmem:[%s242] sm:$0xff]
        %vm281 = vcmask 261120
        %v282 = vsel %vm281, %v280, 0.0
        %283 = vadd.xlane.f32.xlu0 %v282
        %v284 = vpop.xlane.xlu0 %283
        %v285 = vrcp.pop 32.0
        %v286 = vmul.f32 32.0, %v285
        %v287 = vsub.f32 1.0, %v286
        %v288 = vmul.f32 %v285, %v287
        %v289 = vadd.f32 %v285, %v288
        %vm290 = vweird.f32 %v285
        %v291 = vsel %vm290, %v285, %v289
        %v292 = vmul.f32 %v284, %v291
        %v293 = vsub.f32 %v280, %v292
        %v294 = vmul.f32 %v293, %v293
        %v295 = vsel %vm281, %v294, 0.0
        %296 = vadd.xlane.f32.xlu0 %v295
        %v297 = vpop.xlane.xlu0 %296
        %v298 = vrcp.pop 31.0
        %v299 = vmul.f32 31.0, %v298
        %v300 = vsub.f32 1.0, %v299
        %v301 = vmul.f32 %v298, %v300
        %v302 = vadd.f32 %v298, %v301
        %vm303 = vweird.f32 %v298
        %v304 = vsel %vm303, %v298, %v302
        %v305 = vmul.f32 %v297, %v304
        %v306 = vld [vmem:[%s2] sm:$0x1]
        %v308 = vperm.slane %v306, 0
        %v310 = vmul.f32 %v308, %v293
        %v311 = vrsqrt.pop %v305
        %v312 = vmul.f32 %v311, %v305
        %v313 = vmul.f32 %v312, %v311
        %v314 = vmul.f32 0.5, %v313
        %v315 = vsub.f32 1.5, %v314
        %v316 = vmul.f32 %v311, %v315
        %v317 = vmul.f32 %v305, %v316
        %vm318 = vcmp.eq.f32.partialorder %v305, inf
        %v319 = vsel %vm318, %v305, %v317
        %vm320 = vcmp.eq.f32.partialorder %v305, 0.0
        %v321 = vand.u32 %v305, 2147483648
        %v322 = vsel %vm320, %v321, %v319
        %v323 = vadd.f32 %v322, 1e-06
        %v324 = vrcp.pop %v323
        %v325 = vmul.f32 %v323, %v324
        %v326 = vsub.f32 1.0, %v325
        %v327 = vmul.f32 %v324, %v326
        %v328 = vadd.f32 %v324, %v327
        %vm329 = vweird.f32 %v323
        %vm330 = vweird.f32 %v324
        %vm331 = vmor %vm329, %vm330
        %v332 = vsel %vm331, %v324, %v328
        %v333 = vand.u32 2147483647, %v323
        %vm334 = vcmp.eq.f32.partialorder %v333, 8.507059e+37
        %v335 = vand.u32 %v323, 2147483648
        %v336 = vor.u32 1.1754944e-38, %v335
        %v337 = vsel %vm334, %v336, %v332
        %v338 = vmul.f32 %v310, %v337
        %v339 = vld [vmem:[%s3] sm:$0x1]
        %v341 = vperm.slane %v339, 0
        %v343 = vadd.f32 %v338, %v341
        %v344 = vld [vmem:[%s1] sm:$0xff]
        %v345 = vld [vmem:[%s1 + $0x8] sm:$0xff]
        %v346 = vld [vmem:[%s1 + $0x10] sm:$0xff]
        %v347 = vld [vmem:[%s1 + $0x18] sm:$0xff]
        %v349 = vsel %vm281, %v343, 0
        %351 = vmatpush.msra.mxu0 0.0
        %352 = vmatpush.msra.mxu0 0.0
        %353 = vmatpush.msra.mxu0 0.0
        %354 = vmatpush.msra.mxu0 0.0
        %355 = vmatpush.msra.mxu0 0.0
        %356 = vmatpush.msra.mxu0 0.0
        %357 = vmatpush.msra.mxu0 0.0
        %358 = vmatpush.msra.mxu0 0.0
        %359 = vmatpush.msra.mxu0 0.0
        %360 = vmatpush.msra.mxu0 0.0
        %361 = vmatpush.msra.mxu0 0.0
        %362 = vmatpush.msra.mxu0 0.0
        %363 = vmatpush.msra.mxu0 %v347
        %364 = vmatpush.msra.mxu0 %v346
        %365 = vmatpush.msra.mxu0 %v345
        %366 = vmatpush.msra.mxu0 %v344
        %367 = vmatmul.f32.gmra.mxu0 %v349
        %v368 = vpop.f32.mrf.mxu0
        %v369 = vadd.f32 0.0, %v368
        %370 = vdwg.mxu0
        %371 = vst.msk [vmem:[%s269] sm:$0xff] %vm281, %v369
        %v372 = vtanh.pop %v369
        %v373 = vld [vmem:[%s4] sm:$0xff]
        %v374 = vld [vmem:[%s4 + $0x8] sm:$0xff]
        %v375 = vld [vmem:[%s4 + $0x10] sm:$0xff]
        %v376 = vld [vmem:[%s4 + $0x18] sm:$0xff]
        %v378 = vsel %vm281, %v372, 0
        %380 = vmatpush.msra.mxu0 0.0
        %381 = vmatpush.msra.mxu0 0.0
        %382 = vmatpush.msra.mxu0 0.0
        %383 = vmatpush.msra.mxu0 0.0
        %384 = vmatpush.msra.mxu0 0.0
        %385 = vmatpush.msra.mxu0 0.0
        %386 = vmatpush.msra.mxu0 0.0
        %387 = vmatpush.msra.mxu0 0.0
        %388 = vmatpush.msra.mxu0 0.0
        %389 = vmatpush.msra.mxu0 0.0
        %390 = vmatpush.msra.mxu0 0.0
        %391 = vmatpush.msra.mxu0 0.0
        %392 = vmatpush.msra.mxu0 %v376
        %393 = vmatpush.msra.mxu0 %v375
        %394 = vmatpush.msra.mxu0 %v374
        %395 = vmatpush.msra.mxu0 %v373
        %396 = vmatmul.f32.gmra.mxu0 %v378
        %v397 = vpop.f32.mrf.mxu0
        %v398 = vadd.f32 0.0, %v397
        %399 = vdwg.mxu0
        %vm400 = vcmask 64512
        %401 = vst.msk [vmem:[%s279] sm:$0xff] %vm400, %v398
        %s402 = sand.u32 %s142, 1
        %s403 = scalar_lea.sflag [#allocation4], %s402
        %s404 = sand.u32 %s142, 1
        %s405 = smul.addr %s404, 8
        %s406 = scalar_lea.vmem [#allocation5], %s405
        %p407 = scmp.lt.s32.totalorder %s24, 1
        %s408 = scalar_select %p407, %s24, 1
        %s409 = smul.addr %s408, 8
        %s410 = scalar_lea.vmem %s6, %s409
        // Predicated region
        $region45: #{tpu_custom_call.1} parent=39 // pred_check
          %p411 = pneg %p152
        $region46: #{tpu_custom_call.1} parent=39 // pred_check_branch
          %413 = sbr.rel (%p411) target = $region48
        $region47: #{tpu_custom_call.1} parent=39 // pred_region
          %415 = vsyncadd %s403, 0
          %s416 = smul.addr %s24, 8
          %s417 = scalar_lea.hbm %s5, %s416
          %s419 = sshll.u32 %s406, 4
          %s420 = int_to_ptr.vmem [resolvable:$true] %s419
          %s421 = sshll.u32 %s417, 4
          %s422 = int_to_ptr.hbm [resolvable:$true] %s421
          %424 = dma.vmem_to_hbm [thread:$0]  %s420, 128, %s422, %s403
        $region48: #{tpu_custom_call.1} parent=39 // pred_fallthru
          _
        // Predicated region
        $region49: #{tpu_custom_call.1} parent=39 // pred_check
          %p425 = pneg %p178
        $region50: #{tpu_custom_call.1} parent=39 // pred_check_branch
          %427 = sbr.rel (%p425) target = $region52
        $region51: #{tpu_custom_call.1} parent=39 // pred_region
          _
        $region52: #{tpu_custom_call.1} parent=39 // pred_fallthru
          _
      $region40: #{tpu_custom_call.1} parent=5 // pred_fallthru
        _
      %p428 = scmp.le.s32.totalorder 2, %s19
      // Predicated region
      $region53: #{tpu_custom_call.1} parent=5 // pred_check
        %p429 = pneg %p428
      $region54: #{tpu_custom_call.1} parent=5 // pred_check_branch
        %431 = sbr.rel (%p429) target = $region56
      $region55: #{tpu_custom_call.1} parent=5 // pred_region
        %s432 = ssub.s32 %s19, 2
        // Predicated region
        $region57: #{tpu_custom_call.1} parent=55 // pred_check
          %p433 = pneg %p158
        $region58: #{tpu_custom_call.1} parent=55 // pred_check_branch
          %435 = sbr.rel (%p433) target = $region60
        $region59: #{tpu_custom_call.1} parent=55 // pred_region
          %s436 = sand.u32 %s143, 1
          %s437 = scalar_lea.sflag [#allocation4], %s436
          %s438 = sand.u32 %s143, 1
          %s439 = smul.addr %s438, 8
          %s440 = scalar_lea.vmem [#allocation5], %s439
          %442 = dma.done %s437, 128
        $region60: #{tpu_custom_call.1} parent=55 // pred_fallthru
          _
        // Predicated region
        $region61: #{tpu_custom_call.1} parent=55 // pred_check
          %p443 = pneg %p184
        $region62: #{tpu_custom_call.1} parent=55 // pred_check_branch
          %445 = sbr.rel (%p443) target = $region64
        $region63: #{tpu_custom_call.1} parent=55 // pred_region
          %p446 = scmp.lt.s32.totalorder %s25, 1
          %s447 = scalar_select %p446, %s25, 1
          %s448 = smul.addr %s447, 8
          %s449 = scalar_lea.vmem %s6, %s448
        $region64: #{tpu_custom_call.1} parent=55 // pred_fallthru
          _
      $region56: #{tpu_custom_call.1} parent=5 // pred_fallthru
        _
    $region6: #{tpu_custom_call.1} parent=1 // loop_footer
      %s23 = sadd.s32 1, %s19
    $region7: #{tpu_custom_call.1} parent=1 // loop_footer_branch
      %18 = sbr.rel target = $region3
    $region8: #{tpu_custom_call.1} parent=1 // loop_exit
      _
    %450 = vsyncpa [#allocation3], 1
    %s451 = scalar_lea.sflag [#allocation3], 1
    %452 = vsyncpa %s451, 1
    %453 = vsyncpa [#allocation4], 1
    %s454 = scalar_lea.sflag [#allocation4], 1
    %455 = vsyncpa %s454, 1

</llo_original>
